<compile_context>
chip_gen: v7x
topology: tpu7x:2x2x1
jax: 0.10.0
libtpu: 0.0.40
codegen_flags: <defaults>
</compile_context>

<pallas_src>
import functools

import jax
import jax.numpy as jnp
from jax.experimental import pallas as pl
from jax.experimental.pallas import tpu as pltpu

NEG_SLOPE = 0.01  # torch.nn.LeakyReLU default


def _round_up(x, m):
    return ((x + m - 1) // m) * m


def masked_affine_flow_kernel(z_ref, slab_ref, z_out_ref, logdet_ref, *,
                              dim, hidden, region):
    H2 = 2 * hidden
    c1, c2 = region, 2 * region

    zt = z_ref[...]                                    # (dim, TB) -- batch on lanes

    # ---- static slices of the packed, grid-invariant parameter slab ----
    w1 = slab_ref[:, 0:dim]                            # (2H, dim)   fused [ws1.T ; wt1.T]
    b1 = slab_ref[:, dim:dim + 1]                      # (2H, 1)
    bm = slab_ref[0:dim, dim + 1:dim + 2]              # (dim, 1)    binary mask b
    w2 = slab_ref[:, c1:c1 + H2]                       # (2H, 2H)    block-diag [ws2.T | wt2.T]
    b2 = slab_ref[:, c1 + H2:c1 + H2 + 1]              # (2H, 1)
    w3 = slab_ref[0:2 * dim, c2:c2 + H2]               # (2dim, 2H)  block-diag [ws3.T | wt3.T]
    b3 = slab_ref[0:2 * dim, c2 + H2:c2 + H2 + 1]      # (2dim, 1)

    z_masked = bm * zt                                 # (dim, TB)

    # ---- layer 1 (K = dim, tiny): VPU broadcast-FMAs instead of an MXU matmul ----
    h = b1 + w1[:, 0:1] * z_masked[0:1, :]             # (2H, TB)
    for d in range(1, dim):
        h = h + w1[:, d:d + 1] * z_masked[d:d + 1, :]
    h = jnp.maximum(h, NEG_SLOPE * h)                  # LeakyReLU

    # ---- layers 2 & 3: s and t networks fused via block-diagonal matmuls ----
    h = jnp.dot(w2, h, preferred_element_type=jnp.float32) + b2
    h = jnp.maximum(h, NEG_SLOPE * h)
    st = jnp.dot(w3, h, preferred_element_type=jnp.float32) + b3   # (2dim, TB)
    st = jnp.where(jnp.isfinite(st), st, jnp.float32(jnp.nan))

    scale = st[0:dim, :]                               # s-network output
    trans = st[dim:2 * dim, :]                         # t-network output

    one_minus_b = 1.0 - bm                             # (dim, 1)
    z_out_ref[...] = z_masked + one_minus_b * (zt * jnp.exp(scale) + trans)
    # Reduce over the feature (sublane) axis -> lane-dense (1, TB) log_det block.
    logdet_ref[...] = jnp.sum(one_minus_b * scale, axis=0, keepdims=True)


@functools.partial(jax.jit, static_argnames=("batch_tile",))
def masked_affine_flow_forward(z, b, s_params, t_params, *, batch_tile=None):
    """Runs the flow forward. z: (B, dim); b: mask with exactly `dim` elements;
    params are (w1 (dim,H), b1 (1,H), w2 (H,H), b2 (1,H), w3 (H,dim), b3 (1,dim))."""
    z = z.astype(jnp.float32)
    B, dim = z.shape
    ws1, bs1, ws2, bs2, ws3, bs3 = s_params
    wt1, bt1, wt2, bt2, wt3, bt3 = t_params
    hidden = ws1.shape[1]
    H2 = 2 * hidden

    b_flat = jnp.reshape(b.astype(jnp.float32), (-1,))
    assert b_flat.shape[0] == dim, "mask must have exactly `dim` elements"

    # Batch tile: aim for ~2 large lane-dense grid steps (keeps both v7x TCs busy while
    # amortizing per-step overhead); multiple of 128, capped so intermediates stay small.
    if batch_tile is None:
        half = -(-B // 2)  # ceil(B/2)
        batch_tile = min(4096, max(128, _round_up(half, 128)))
    Bp = _round_up(B, batch_tile)

    # Transposed, lane-dense layout: batch on the 128-lane axis.
    zT = z.T                                           # (dim, B)
    if Bp != B:
        zT = jnp.pad(zT, ((0, 0), (0, Bp - B)))

    # ---- pack every parameter (and the mask) into one lane-aligned slab ----
    region = max(128, _round_up(H2 + 1, 128), _round_up(dim + 2, 128))
    slab = jnp.zeros((H2, 3 * region), jnp.float32)
    # layer 1 (fused s|t): W1c (2H, dim), b1c, mask
    slab = slab.at[:, 0:dim].set(jnp.concatenate([ws1.T, wt1.T], axis=0))
    slab = slab.at[:, dim].set(jnp.concatenate([jnp.reshape(bs1, (-1,)),
                                                jnp.reshape(bt1, (-1,))]))
    slab = slab.at[0:dim, dim + 1].set(b_flat)
    # layer 2: block-diagonal (2H, 2H)
    slab = slab.at[0:hidden, region:region + hidden].set(ws2.T)
    slab = slab.at[hidden:H2, region + hidden:region + H2].set(wt2.T)
    slab = slab.at[:, region + H2].set(jnp.concatenate([jnp.reshape(bs2, (-1,)),
                                                        jnp.reshape(bt2, (-1,))]))
    # layer 3: block-diagonal (2*dim, 2H)
    c2 = 2 * region
    slab = slab.at[0:dim, c2:c2 + hidden].set(ws3.T)
    slab = slab.at[dim:2 * dim, c2 + hidden:c2 + H2].set(wt3.T)
    slab = slab.at[0:dim, c2 + H2].set(jnp.reshape(bs3, (-1,)))
    slab = slab.at[dim:2 * dim, c2 + H2].set(jnp.reshape(bt3, (-1,)))

    grid = (Bp // batch_tile,)
    kernel = functools.partial(masked_affine_flow_kernel,
                               dim=dim, hidden=hidden, region=region)

    z_out_t, log_det = pl.pallas_call(
        kernel,
        out_shape=[
            jax.ShapeDtypeStruct((dim, Bp), jnp.float32),
            jax.ShapeDtypeStruct((1, Bp), jnp.float32),
        ],
        grid_spec=pltpu.PrefetchScalarGridSpec(
            num_scalar_prefetch=0,
            grid=grid,
            in_specs=[
                pl.BlockSpec((dim, batch_tile), lambda i: (0, i)),       # z^T tiles
                pl.BlockSpec((H2, 3 * region), lambda i: (0, 0)),        # param slab (invariant)
            ],
            out_specs=[
                pl.BlockSpec((dim, batch_tile), lambda i: (0, i)),       # z_out^T, lane-dense
                pl.BlockSpec((1, batch_tile), lambda i: (0, i)),         # log_det, lane-dense
            ],
        ),
        compiler_params=pltpu.CompilerParams(
            dimension_semantics=("parallel",)),   # shards batch tiles across v7x TCs
    )(zT, slab)

    if Bp != B:
        z_out_t = z_out_t[:, :B]
        log_det = log_det[:, :B]
    # Back to PyTorch layout: z_ (B, dim), log_det (B,)
    return z_out_t.T, log_det[0]


def _init_mlp_params(key, dim, hidden):
    """Deterministic init mimicking torch Linear default (uniform +- 1/sqrt(fan_in))."""
    keys = jax.random.split(key, 6)

    def lin(kw, kb, fan_in, fan_out):
        bound = 1.0 / jnp.sqrt(jnp.float32(fan_in))
        w = jax.random.uniform(kw, (fan_in, fan_out), jnp.float32, -bound, bound)
        b = jax.random.uniform(kb, (1, fan_out), jnp.float32, -bound, bound)
        return w, b

    w1, b1 = lin(keys[0], keys[1], dim, hidden)
    w2, b2 = lin(keys[2], keys[3], hidden, hidden)
    w3, b3 = lin(keys[4], keys[5], hidden, dim)
    return (w1, b1, w2, b2, w3, b3)


def _reference_forward(z, b, s_params, t_params):
    """Pure-JAX reference mirroring the PyTorch forward, for sanity checking."""
    def mlp(x, p):
        w1, b1, w2, b2, w3, b3 = p
        h = x @ w1 + b1
        h = jnp.where(h > 0, h, NEG_SLOPE * h)
        h = h @ w2 + b2
        h = jnp.where(h > 0, h, NEG_SLOPE * h)
        return h @ w3 + b3

    z_masked = b * z
    scale = mlp(z_masked, s_params)
    scale = jnp.where(jnp.isfinite(scale), scale, jnp.nan)
    trans = mlp(z_masked, t_params)
    trans = jnp.where(jnp.isfinite(trans), trans, jnp.nan)
    z_ = z_masked + (1 - b) * (z * jnp.exp(scale) + trans)
    log_det = jnp.sum((1 - b) * scale, axis=1)
    return z_, log_det


if __name__ == "__main__":
    key = jax.random.PRNGKey(0)
    k_z, k_s, k_t = jax.random.split(key, 3)

    # Small model dims; batch picked so the auto tile (512) gives a 2-step parallel grid.
    batch, dim, hidden = 1024, 4, 32

    z = jax.random.normal(k_z, (batch, dim), jnp.float32)
    # Alternating binary mask (RealNVP-style checkerboard over features),
    # stored as (1, dim) matching `b.view(1, *b.size())`.
    b_mask = (jnp.arange(dim) % 2).astype(jnp.float32).reshape(1, dim)

    s_params = _init_mlp_params(k_s, dim, hidden)
    t_params = _init_mlp_params(k_t, dim, hidden)

    z_out, log_det = masked_affine_flow_forward(z, b_mask, s_params, t_params)
    jax.block_until_ready((z_out, log_det))

    z_ref, ld_ref = _reference_forward(z, b_mask, s_params, t_params)
    assert z_out.shape == (batch, dim) and log_det.shape == (batch,)
    assert jnp.allclose(z_out, z_ref, atol=1e-5, rtol=1e-5)
    assert jnp.allclose(log_det, ld_ref, atol=1e-5, rtol=1e-5)

    print("KERNEL_OK")
</pallas_src>

<mosaic_0001>
module attributes {stable_mosaic.version = 11 : i64} {
  func.func @masked_affine_flow_kernel(%arg0: i32, %arg1: memref<4x512xf32, #tpu.memory_space<vmem>>, %arg2: memref<64x384xf32, #tpu.memory_space<vmem>>, %arg3: memref<4x512xf32, #tpu.memory_space<vmem>>, %arg4: memref<1x512xf32, #tpu.memory_space<vmem>>) attributes {dimension_semantics = [#tpu.dimension_semantics<parallel>], iteration_bounds = array<i64: 2>, scalar_prefetch = 0 : i64, scratch_operands = 0 : i64, tpu.core_type = #tpu.core_type<tc>, window_params = [{transform_indices = @transform_0, window_bounds = array<i64: 4, 512>}, {pipeline_mode = #tpu.pipeline_mode<synchronous>, transform_indices = @transform_1, window_bounds = array<i64: 64, 384>}, {transform_indices = @transform_2, window_bounds = array<i64: 4, 512>}, {transform_indices = @transform_3, window_bounds = array<i64: 1, 512>}]} {
    %c0 = arith.constant 0 : index
    %c0_0 = arith.constant 0 : index
    %0 = vector.load %arg1[%c0, %c0_0] : memref<4x512xf32, #tpu.memory_space<vmem>>, vector<4x512xf32>
    %c0_1 = arith.constant 0 : index
    %c0_2 = arith.constant 0 : index
    %1 = vector.load %arg2[%c0_1, %c0_2] : memref<64x384xf32, #tpu.memory_space<vmem>>, vector<64x4xf32>
    %c0_3 = arith.constant 0 : index
    %c4 = arith.constant 4 : index
    %2 = vector.load %arg2[%c0_3, %c4] : memref<64x384xf32, #tpu.memory_space<vmem>>, vector<64x1xf32>
    %c0_4 = arith.constant 0 : index
    %c5 = arith.constant 5 : index
    %3 = vector.load %arg2[%c0_4, %c5] : memref<64x384xf32, #tpu.memory_space<vmem>>, vector<4x1xf32>
    %c0_5 = arith.constant 0 : index
    %c128 = arith.constant 128 : index
    %4 = vector.load %arg2[%c0_5, %c128] : memref<64x384xf32, #tpu.memory_space<vmem>>, vector<64x64xf32>
    %c0_6 = arith.constant 0 : index
    %c192 = arith.constant 192 : index
    %5 = vector.load %arg2[%c0_6, %c192] : memref<64x384xf32, #tpu.memory_space<vmem>>, vector<64x1xf32>
    %c0_7 = arith.constant 0 : index
    %c256 = arith.constant 256 : index
    %6 = vector.load %arg2[%c0_7, %c256] : memref<64x384xf32, #tpu.memory_space<vmem>>, vector<8x64xf32>
    %c0_8 = arith.constant 0 : index
    %c320 = arith.constant 320 : index
    %7 = vector.load %arg2[%c0_8, %c320] : memref<64x384xf32, #tpu.memory_space<vmem>>, vector<8x1xf32>
    %8 = vector.broadcast %3 : vector<4x1xf32> to vector<4x512xf32>
    %9 = arith.mulf %8, %0 : vector<4x512xf32>
    %10 = vector.extract_strided_slice %1 {offsets = [0, 0], sizes = [64, 1], strides = [1, 1]} : vector<64x4xf32> to vector<64x1xf32>
    %11 = vector.extract_strided_slice %9 {offsets = [0, 0], sizes = [1, 512], strides = [1, 1]} : vector<4x512xf32> to vector<1x512xf32>
    %12 = vector.broadcast %10 : vector<64x1xf32> to vector<64x512xf32>
    %13 = vector.broadcast %11 : vector<1x512xf32> to vector<64x512xf32>
    %14 = arith.mulf %12, %13 : vector<64x512xf32>
    %15 = vector.broadcast %2 : vector<64x1xf32> to vector<64x512xf32>
    %16 = arith.addf %15, %14 : vector<64x512xf32>
    %17 = vector.extract_strided_slice %1 {offsets = [0, 1], sizes = [64, 1], strides = [1, 1]} : vector<64x4xf32> to vector<64x1xf32>
    %18 = vector.extract_strided_slice %9 {offsets = [1, 0], sizes = [1, 512], strides = [1, 1]} : vector<4x512xf32> to vector<1x512xf32>
    %19 = vector.broadcast %17 : vector<64x1xf32> to vector<64x512xf32>
    %20 = vector.broadcast %18 : vector<1x512xf32> to vector<64x512xf32>
    %21 = arith.mulf %19, %20 : vector<64x512xf32>
    %22 = arith.addf %16, %21 : vector<64x512xf32>
    %23 = vector.extract_strided_slice %1 {offsets = [0, 2], sizes = [64, 1], strides = [1, 1]} : vector<64x4xf32> to vector<64x1xf32>
    %24 = vector.extract_strided_slice %9 {offsets = [2, 0], sizes = [1, 512], strides = [1, 1]} : vector<4x512xf32> to vector<1x512xf32>
    %25 = vector.broadcast %23 : vector<64x1xf32> to vector<64x512xf32>
    %26 = vector.broadcast %24 : vector<1x512xf32> to vector<64x512xf32>
    %27 = arith.mulf %25, %26 : vector<64x512xf32>
    %28 = arith.addf %22, %27 : vector<64x512xf32>
    %29 = vector.extract_strided_slice %1 {offsets = [0, 3], sizes = [64, 1], strides = [1, 1]} : vector<64x4xf32> to vector<64x1xf32>
    %30 = vector.extract_strided_slice %9 {offsets = [3, 0], sizes = [1, 512], strides = [1, 1]} : vector<4x512xf32> to vector<1x512xf32>
    %31 = vector.broadcast %29 : vector<64x1xf32> to vector<64x512xf32>
    %32 = vector.broadcast %30 : vector<1x512xf32> to vector<64x512xf32>
    %33 = arith.mulf %31, %32 : vector<64x512xf32>
    %34 = arith.addf %28, %33 : vector<64x512xf32>
    %cst = arith.constant 0.00999999977 : f32
    %35 = vector.broadcast %cst : f32 to vector<64x512xf32>
    %36 = arith.mulf %35, %34 : vector<64x512xf32>
    %37 = arith.maximumf %34, %36 : vector<64x512xf32>
    %cst_9 = arith.constant dense<0.000000e+00> : vector<64x512xf32>
    %38 = tpu.matmul %4, %37, %cst_9 {dimension_numbers = #tpu.dot_dimension_numbers<[1], [0], [0], [1], [0, 0, 1, 1], [], []>} : vector<64x64xf32>, vector<64x512xf32>, vector<64x512xf32> -> vector<64x512xf32>
    %39 = vector.broadcast %5 : vector<64x1xf32> to vector<64x512xf32>
    %40 = arith.addf %38, %39 : vector<64x512xf32>
    %cst_10 = arith.constant 0.00999999977 : f32
    %41 = vector.broadcast %cst_10 : f32 to vector<64x512xf32>
    %42 = arith.mulf %41, %40 : vector<64x512xf32>
    %43 = arith.maximumf %40, %42 : vector<64x512xf32>
    %cst_11 = arith.constant dense<0.000000e+00> : vector<8x512xf32>
    %44 = tpu.matmul %6, %43, %cst_11 {dimension_numbers = #tpu.dot_dimension_numbers<[1], [0], [0], [1], [0, 0, 1, 1], [], []>} : vector<8x64xf32>, vector<64x512xf32>, vector<8x512xf32> -> vector<8x512xf32>
    %45 = vector.broadcast %7 : vector<8x1xf32> to vector<8x512xf32>
    %46 = arith.addf %44, %45 : vector<8x512xf32>
    %47 = tpu.weird %46 : vector<8x512xf32> -> vector<8x512xi1>
    %cst_12 = arith.constant dense<true> : vector<8x512xi1>
    %48 = arith.xori %47, %cst_12 : vector<8x512xi1>
    %cst_13 = arith.constant 0x7FC00000 : f32
    %49 = vector.broadcast %cst_13 : f32 to vector<8x512xf32>
    %50 = arith.select %48, %46, %49 : vector<8x512xi1>, vector<8x512xf32>
    %51 = vector.extract_strided_slice %50 {offsets = [0, 0], sizes = [4, 512], strides = [1, 1]} : vector<8x512xf32> to vector<4x512xf32>
    %52 = vector.extract_strided_slice %50 {offsets = [4, 0], sizes = [4, 512], strides = [1, 1]} : vector<8x512xf32> to vector<4x512xf32>
    %cst_14 = arith.constant 1.000000e+00 : f32
    %53 = vector.broadcast %cst_14 : f32 to vector<4x1xf32>
    %54 = arith.subf %53, %3 : vector<4x1xf32>
    %55 = math.exp %51 : vector<4x512xf32>
    %56 = arith.mulf %0, %55 : vector<4x512xf32>
    %57 = arith.addf %56, %52 : vector<4x512xf32>
    %58 = vector.broadcast %54 : vector<4x1xf32> to vector<4x512xf32>
    %59 = arith.mulf %58, %57 : vector<4x512xf32>
    %60 = arith.addf %9, %59 : vector<4x512xf32>
    %c0_15 = arith.constant 0 : index
    %c0_16 = arith.constant 0 : index
    %61 = vector.load %arg3[%c0_15, %c0_16] : memref<4x512xf32, #tpu.memory_space<vmem>>, vector<4x512xf32>
    tpu.vector_store %arg3[%c0_15, %c0_16], %60 {strides = array<i32>} : memref<4x512xf32, #tpu.memory_space<vmem>>, vector<4x512xf32>,
    %62 = vector.broadcast %54 : vector<4x1xf32> to vector<4x512xf32>
    %63 = arith.mulf %62, %51 : vector<4x512xf32>
    %cst_17 = arith.constant dense<0.000000e+00> : vector<512xf32>
    %64 = vector.multi_reduction <add>, %63, %cst_17 [0] : vector<4x512xf32> to vector<512xf32>
    %65 = vector.shape_cast %64 : vector<512xf32> to vector<1x512xf32>
    %c0_18 = arith.constant 0 : index
    %c0_19 = arith.constant 0 : index
    %66 = vector.load %arg4[%c0_18, %c0_19] : memref<1x512xf32, #tpu.memory_space<vmem>>, vector<1x512xf32>
    tpu.vector_store %arg4[%c0_18, %c0_19], %65 {strides = array<i32>} : memref<1x512xf32, #tpu.memory_space<vmem>>, vector<1x512xf32>,
    return
  }
  func.func @transform_0(%arg0: i32) -> (i32, i32) {
    %c0_i32 = arith.constant 0 : i32
    %c0_i32_0 = arith.constant 0 : i32
    return %c0_i32, %arg0 : i32, i32
  }
  func.func @transform_1(%arg0: i32) -> (i32, i32) {
    %c0_i32 = arith.constant 0 : i32
    %c0_i32_0 = arith.constant 0 : i32
    %c0_i32_1 = arith.constant 0 : i32
    return %c0_i32, %c0_i32_0 : i32, i32
  }
  func.func @transform_2(%arg0: i32) -> (i32, i32) {
    %c0_i32 = arith.constant 0 : i32
    %c0_i32_0 = arith.constant 0 : i32
    return %c0_i32, %arg0 : i32, i32
  }
  func.func @transform_3(%arg0: i32) -> (i32, i32) {
    %c0_i32 = arith.constant 0 : i32
    %c0_i32_0 = arith.constant 0 : i32
    return %c0_i32, %arg0 : i32, i32
  }
}

</mosaic_0001>

<llo_original>
// kernel: masked_affine_flow_forward.1
$region0: #{masked_affine_flow_forward.1}
  #allocation0 [shape = 'u32[]', space=smem, size = 0x4, offset = 0x4, fixed_abs, tag = 'smem constant byte address 0x4 - core index']
  #allocation1 [shape = 'u32[144,128]{1,0:T(1,128)}', space=vmem, size = 0x12000, scoped, tag = 'internal scratch']
  %s0 = inlined_call_operand.vmem [shape: f32[4,1024], index: 0, kind: input, shape index: {}]
  %s1 = inlined_call_operand.vmem [shape: f32[64,384], index: 1, kind: input, shape index: {}]
  %s2 = inlined_call_operand.hbm [shape: f32[4,1024], index: 2, kind: output, shape index: {0}]
  %s3 = inlined_call_operand.hbm [shape: f32[1,1024], index: 3, kind: output, shape index: {1}]
  %4 = xla_tuple %s2, %s3
  %s5 = sld [smem:[#allocation0]]
  $region49: #{masked_affine_flow_forward.1} parent=0
    _
  %s7 = ssub.s32 1, %s5
  %s8 = scalar_select 0, %s7, %s5
  $region1: #{masked_affine_flow_forward.1} parent=0
    #allocation2 [shape = 'u8[16384]{0}', space=vmem, size = 0x4000, scoped, tag = 'output window, operand 0']
    #allocation3 [shape = 's32[2]{0}', space=sflag, size = 0x8, scoped, tag = 'scoped memory for masked_affine_flow_forward.1']
    #allocation4 [shape = 'u8[4096]{0}', space=vmem, size = 0x1000, scoped, tag = 'output window, operand 1']
    #allocation5 [shape = 's32[2]{0}', space=sflag, size = 0x8, scoped, tag = 'scoped memory for masked_affine_flow_forward.1']
    %9 = vsyncpa [#allocation3], 0
    %s10 = scalar_lea.sflag [#allocation3], 1
    %11 = vsyncpa %s10, 0
    %12 = vsyncpa [#allocation5], 0
    %s13 = scalar_lea.sflag [#allocation5], 1
    %14 = vsyncpa %s13, 0
    loop: start=0, step=1, limit=4
    $region2: #{masked_affine_flow_forward.1} parent=1 // loop_pre_header
      _
    $region3: #{masked_affine_flow_forward.1} parent=1 // loop_header
      %s16 = sphi 0, %s20
      %p17 = scmp.ge.s32.totalorder %s16, 4
      %s26 = sphi 0, %s28
      %s29 = sphi 0, %s26
      %s30 = sphi 0, %s29
      %s46 = sphi 0, %s30
      %s50 = sphi 0, %s50
      %s52 = sphi 0, %s50
      %s53 = sphi 0, %s52
      %s67 = sphi 0, %s53
      %s73 = sphi 0, %s75
      %s76 = sphi 0, %s73
      %s77 = sphi 0, %s76
      %s93 = sphi 0, %s77
      %s99 = sphi 0, %s101
      %s102 = sphi 0, %s99
      %s103 = sphi 0, %s102
      %s119 = sphi 0, %s103
    $region4: #{masked_affine_flow_forward.1} parent=1 // loop_header_branch
      %19 = sbr.rel (%p17) target = $region8
    $region5: #{masked_affine_flow_forward.1} parent=1 // loop_body
      %s21 = ssub.s32 %s16, 1
      %s22 = ssub.s32 %s16, 2
      %s23 = sadd.s32 %s16, 1
      %s24 = ssub.s32 %s16, %s23
      %p25 = scmp.eq.s32.totalorder %s24, 0
      %s27 = sadd.s32 %s26, 1
      %s28 = scalar_select %p25, %s26, %s27
      %p31 = pneg %p25
      %p32 = scmp.eq.s32.totalorder %s16, 1
      %p33 = por %p31, %p32
      %p34 = scmp.ne.s32.totalorder %s26, %s29
      %p35 = scmp.eq.s32.totalorder %s16, 0
      %p36 = por %p34, %p35
      %p37 = scmp.ne.s32.totalorder %s26, %s29
      %p38 = scmp.eq.s32.totalorder %s21, 1
      %p39 = por %p37, %p38
      %p40 = scmp.ne.s32.totalorder %s29, %s30
      %p41 = scmp.eq.s32.totalorder %s21, 0
      %p42 = por %p40, %p41
      %p43 = scmp.ne.s32.totalorder %s29, %s30
      %p44 = scmp.eq.s32.totalorder %s22, 1
      %p45 = por %p43, %p44
      %p47 = scmp.ne.s32.totalorder %s30, %s46
      %p48 = scmp.eq.s32.totalorder %s22, 0
      %p49 = por %p47, %p48
      %s51 = sadd.s32 %s50, 1
      %p54 = scmp.eq.s32.totalorder %s16, 1
      %p55 = scmp.ne.s32.totalorder %s50, %s52
      %p56 = scmp.eq.s32.totalorder %s16, 0
      %p57 = por %p55, %p56
      %p58 = scmp.ne.s32.totalorder %s50, %s52
      %p59 = scmp.eq.s32.totalorder %s21, 1
      %p60 = por %p58, %p59
      %p61 = scmp.ne.s32.totalorder %s52, %s53
      %p62 = scmp.eq.s32.totalorder %s21, 0
      %p63 = por %p61, %p62
      %p64 = scmp.ne.s32.totalorder %s52, %s53
      %p65 = scmp.eq.s32.totalorder %s22, 1
      %p66 = por %p64, %p65
      %p68 = scmp.ne.s32.totalorder %s53, %s67
      %p69 = scmp.eq.s32.totalorder %s22, 0
      %p70 = por %p68, %p69
      %s71 = ssub.s32 %s16, %s23
      %p72 = scmp.eq.s32.totalorder %s71, 0
      %s74 = sadd.s32 %s73, 1
      %s75 = scalar_select %p72, %s73, %s74
      %p78 = pneg %p72
      %p79 = scmp.eq.s32.totalorder %s16, 1
      %p80 = por %p78, %p79
      %p81 = scmp.ne.s32.totalorder %s73, %s76
      %p82 = scmp.eq.s32.totalorder %s16, 0
      %p83 = por %p81, %p82
      %p84 = scmp.ne.s32.totalorder %s73, %s76
      %p85 = scmp.eq.s32.totalorder %s21, 1
      %p86 = por %p84, %p85
      %p87 = scmp.ne.s32.totalorder %s76, %s77
      %p88 = scmp.eq.s32.totalorder %s21, 0
      %p89 = por %p87, %p88
      %p90 = scmp.ne.s32.totalorder %s76, %s77
      %p91 = scmp.eq.s32.totalorder %s22, 1
      %p92 = por %p90, %p91
      %p94 = scmp.ne.s32.totalorder %s77, %s93
      %p95 = scmp.eq.s32.totalorder %s22, 0
      %p96 = por %p94, %p95
      %s97 = ssub.s32 %s16, %s23
      %p98 = scmp.eq.s32.totalorder %s97, 0
      %s100 = sadd.s32 %s99, 1
      %s101 = scalar_select %p98, %s99, %s100
      %p104 = pneg %p98
      %p105 = scmp.eq.s32.totalorder %s16, 1
      %p106 = por %p104, %p105
      %p107 = scmp.ne.s32.totalorder %s99, %s102
      %p108 = scmp.eq.s32.totalorder %s16, 0
      %p109 = por %p107, %p108
      %p110 = scmp.ne.s32.totalorder %s99, %s102
      %p111 = scmp.eq.s32.totalorder %s21, 1
      %p112 = por %p110, %p111
      %p113 = scmp.ne.s32.totalorder %s102, %s103
      %p114 = scmp.eq.s32.totalorder %s21, 0
      %p115 = por %p113, %p114
      %p116 = scmp.ne.s32.totalorder %s102, %s103
      %p117 = scmp.eq.s32.totalorder %s22, 1
      %p118 = por %p116, %p117
      %p120 = scmp.ne.s32.totalorder %s103, %s119
      %p121 = scmp.eq.s32.totalorder %s22, 0
      %p122 = por %p120, %p121
      %p123 = scmp.le.s32.totalorder 1, %s16
      %p124 = scmp.lt.s32.totalorder %s16, 3
      %p125 = pnand %p123, %p124
      %p126 = pneg %p125
      // Predicated region
      $region9: #{masked_affine_flow_forward.1} parent=5 // pred_check
        _
      $region10: #{masked_affine_flow_forward.1} parent=5 // pred_check_branch
        %128 = sbr.rel (%p125) target = $region12
      $region11: #{masked_affine_flow_forward.1} parent=5 // pred_region
        %s129 = ssub.s32 %s16, 1
        // Predicated region
        $region13: #{masked_affine_flow_forward.1} parent=11 // pred_check
          %p130 = pneg %p63
        $region14: #{masked_affine_flow_forward.1} parent=11 // pred_check_branch
          %132 = sbr.rel (%p130) target = $region16
        $region15: #{masked_affine_flow_forward.1} parent=11 // pred_region
          _
        $region16: #{masked_affine_flow_forward.1} parent=11 // pred_fallthru
          _
      $region12: #{masked_affine_flow_forward.1} parent=5 // pred_fallthru
        _
      %p133 = scmp.lt.s32.totalorder %s16, 2
      // Predicated region
      $region17: #{masked_affine_flow_forward.1} parent=5 // pred_check
        %p134 = pneg %p133
      $region18: #{masked_affine_flow_forward.1} parent=5 // pred_check_branch
        %136 = sbr.rel (%p134) target = $region20
      $region19: #{masked_affine_flow_forward.1} parent=5 // pred_region
        // Predicated region
        $region21: #{masked_affine_flow_forward.1} parent=19 // pred_check
          %p137 = pneg %p36
        $region22: #{masked_affine_flow_forward.1} parent=19 // pred_check_branch
          %139 = sbr.rel (%p137) target = $region24
        $region23: #{masked_affine_flow_forward.1} parent=19 // pred_region
          %s140 = smul.u32 4, %s16
          %p141 = scmp.lt.s32.totalorder %s140, 7
          %s142 = scalar_select %p141, %s140, 7
          %s143 = smul.addr %s142, 4
          %s144 = scalar_lea.vmem %s0, %s143
          %s145 = smul.u32 4, %s16
        $region24: #{masked_affine_flow_forward.1} parent=19 // pred_fallthru
          _
      $region20: #{masked_affine_flow_forward.1} parent=5 // pred_fallthru
        _
      %p146 = scmp.le.s32.totalorder 1, %s16
      %p147 = scmp.lt.s32.totalorder %s16, 3
      %p148 = pnand %p146, %p147
      %p149 = pneg %p148
      // Predicated region
      $region25: #{masked_affine_flow_forward.1} parent=5 // pred_check
        _
      $region26: #{masked_affine_flow_forward.1} parent=5 // pred_check_branch
        %151 = sbr.rel (%p148) target = $region28
      $region27: #{masked_affine_flow_forward.1} parent=5 // pred_region
        %s152 = ssub.s32 %s16, 1
        %s153 = smul.u32 4, %s21
        %p154 = scmp.lt.s32.totalorder %s153, 7
        %s155 = scalar_select %p154, %s153, 7
        %s156 = smul.addr %s155, 4
        %s157 = scalar_lea.vmem %s0, %s156
        %p158 = pneg %p42
        %p159 = pneg %p39
        %p160 = pneg %p63
        %p161 = pneg %p60
        %p162 = pneg %p89
        %p163 = pneg %p86
        %s164 = sand.u32 %s76, 1
        %s165 = scalar_lea.sflag [#allocation3], %s164
        %s166 = sand.u32 %s76, 1
        %s167 = smul.addr %s166, 16
        %s168 = scalar_lea.vmem [#allocation2], %s167
        %p169 = pneg %p115
        %p170 = pneg %p112
        %s171 = sand.u32 %s102, 1
        %s172 = scalar_lea.sflag [#allocation5], %s171
        %s173 = sand.u32 %s102, 1
        %s174 = smul.addr %s173, 4
        %s175 = scalar_lea.vmem [#allocation4], %s174
        %s176 = smul.u32 4, %s21
        %p177 = scmp.lt.s32.totalorder %s176, 7
        %s178 = scalar_select %p177, %s176, 7
        %s179 = smul.addr %s178, 4
        %s180 = scalar_lea.vmem %s0, %s179
        %s181 = smul.u32 4, %s21
        %s182 = smul.u32 4, %s21
        %s183 = smul.u32 4, %s21
        %v184 = vld [vmem:[%s180] sm:$0xff]
        %v185 = vld [vmem:[%s180 + $0x8] sm:$0xff]
        %v186 = vld [vmem:[%s1] sm:$0xff]
        %v187 = vld [vmem:[%s1 + $0x18] sm:$0xff]
        %v188 = vld [vmem:[%s1 + $0x30] sm:$0xff]
        %v189 = vld [vmem:[%s1 + $0x48] sm:$0xff]
        %v190 = vld [vmem:[%s1 + $0x60] sm:$0xff]
        %v191 = vld [vmem:[%s1 + $0x78] sm:$0xff]
        %v192 = vld [vmem:[%s1 + $0x90] sm:$0xff]
        %v193 = vld [vmem:[%s1 + $0xa8] sm:$0xff]
        %v194 = vld [vmem:[%s1] sm:$0xf]
        %v195 = vld [vmem:[%s1 + $0x8] sm:$0xff]
        %v196 = vld [vmem:[%s1 + $0x20] sm:$0xff]
        %v197 = vld [vmem:[%s1 + $0x38] sm:$0xff]
        %v198 = vld [vmem:[%s1 + $0x50] sm:$0xff]
        %v199 = vld [vmem:[%s1 + $0x68] sm:$0xff]
        %v200 = vld [vmem:[%s1 + $0x80] sm:$0xff]
        %v201 = vld [vmem:[%s1 + $0x98] sm:$0xff]
        %v202 = vld [vmem:[%s1 + $0xb0] sm:$0xff]
        %v203 = vld [vmem:[%s1 + $0x10] sm:$0xff]
        %205 = vset.pattern.permute.xlu0 5
        %206 = vperm.xlu0 %205, %v194
        %v207 = vpop.permute.xlu0 %206
        %v211 = vcombine.high %v184, %v184
        %v212 = vcombine.high %v185, %v185
        %v215 = vmul.f32 %v207, %v184
        %v216 = vmul.f32 %v207, %v211
        %v217 = vmul.f32 %v207, %v185
        %v218 = vmul.f32 %v207, %v212
        %220 = vset.pattern.permute.xlu0 0
        %221 = vperm.xlu0 %220, %v186
        %v222 = vpop.permute.xlu0 %221
        %225 = vset.pattern.permute.xlu0 0
        %226 = vperm.xlu0 %225, %v187
        %v227 = vpop.permute.xlu0 %226
        %230 = vset.pattern.permute.xlu0 0
        %231 = vperm.xlu0 %230, %v188
        %v232 = vpop.permute.xlu0 %231
        %235 = vset.pattern.permute.xlu0 0
        %236 = vperm.xlu0 %235, %v189
        %v237 = vpop.permute.xlu0 %236
        %240 = vset.pattern.permute.xlu0 0
        %241 = vperm.xlu0 %240, %v190
        %v242 = vpop.permute.xlu0 %241
        %245 = vset.pattern.permute.xlu0 0
        %246 = vperm.xlu0 %245, %v191
        %v247 = vpop.permute.xlu0 %246
        %250 = vset.pattern.permute.xlu0 0
        %251 = vperm.xlu0 %250, %v192
        %v252 = vpop.permute.xlu0 %251
        %255 = vset.pattern.permute.xlu0 0
        %256 = vperm.xlu0 %255, %v193
        %v257 = vpop.permute.xlu0 %256
        %v259 = vlaneseq
        %v260 = vshrl.u32 %v259, 7
        %v261 = vsub.s32 0, %v260
        %v262 = vrot.slane %v215, %v261
        %v263 = vlaneseq
        %v264 = vshrl.u32 %v263, 7
        %v265 = vsub.s32 0, %v264
        %v266 = vrot.slane %v216, %v265
        %v267 = vlaneseq
        %v268 = vshrl.u32 %v267, 7
        %v269 = vsub.s32 0, %v268
        %v270 = vrot.slane %v217, %v269
        %v271 = vlaneseq
        %v272 = vshrl.u32 %v271, 7
        %v273 = vsub.s32 0, %v272
        %v274 = vrot.slane %v218, %v273
        %v275 = vmul.f32 %v222, %v262
        %v276 = vmul.f32 %v222, %v266
        %v277 = vmul.f32 %v222, %v270
        %v278 = vmul.f32 %v222, %v274
        %v279 = vmul.f32 %v227, %v262
        %v280 = vmul.f32 %v227, %v266
        %v281 = vmul.f32 %v227, %v270
        %v282 = vmul.f32 %v227, %v274
        %v283 = vmul.f32 %v232, %v262
        %v284 = vmul.f32 %v232, %v266
        %v285 = vmul.f32 %v232, %v270
        %v286 = vmul.f32 %v232, %v274
        %v287 = vmul.f32 %v237, %v262
        %v288 = vmul.f32 %v237, %v266
        %v289 = vmul.f32 %v237, %v270
        %v290 = vmul.f32 %v237, %v274
        %v291 = vmul.f32 %v242, %v262
        %v292 = vmul.f32 %v242, %v266
        %v293 = vmul.f32 %v242, %v270
        %v294 = vmul.f32 %v242, %v274
        %v295 = vmul.f32 %v247, %v262
        %v296 = vmul.f32 %v247, %v266
        %v297 = vmul.f32 %v247, %v270
        %v298 = vmul.f32 %v247, %v274
        %v299 = vmul.f32 %v252, %v262
        %v300 = vmul.f32 %v252, %v266
        %v301 = vmul.f32 %v252, %v270
        %v302 = vmul.f32 %v252, %v274
        %v303 = vmul.f32 %v257, %v262
        %v304 = vmul.f32 %v257, %v266
        %v305 = vmul.f32 %v257, %v270
        %v306 = vmul.f32 %v257, %v274
        %307 = vset.pattern.permute.xlu0 4
        %308 = vperm.xlu0 %307, %v186
        %v309 = vpop.permute.xlu0 %308
        %311 = vset.pattern.permute.xlu0 4
        %312 = vperm.xlu0 %311, %v187
        %v313 = vpop.permute.xlu0 %312
        %315 = vset.pattern.permute.xlu0 4
        %316 = vperm.xlu0 %315, %v188
        %v317 = vpop.permute.xlu0 %316
        %319 = vset.pattern.permute.xlu0 4
        %320 = vperm.xlu0 %319, %v189
        %v321 = vpop.permute.xlu0 %320
        %323 = vset.pattern.permute.xlu0 4
        %324 = vperm.xlu0 %323, %v190
        %v325 = vpop.permute.xlu0 %324
        %327 = vset.pattern.permute.xlu0 4
        %328 = vperm.xlu0 %327, %v191
        %v329 = vpop.permute.xlu0 %328
        %331 = vset.pattern.permute.xlu0 4
        %332 = vperm.xlu0 %331, %v192
        %v333 = vpop.permute.xlu0 %332
        %335 = vset.pattern.permute.xlu0 4
        %336 = vperm.xlu0 %335, %v193
        %v337 = vpop.permute.xlu0 %336
        %v339 = vadd.f32 %v309, %v275
        %v340 = vadd.f32 %v309, %v276
        %v341 = vadd.f32 %v309, %v277
        %v342 = vadd.f32 %v309, %v278
        %v343 = vadd.f32 %v313, %v279
        %v344 = vadd.f32 %v313, %v280
        %v345 = vadd.f32 %v313, %v281
        %v346 = vadd.f32 %v313, %v282
        %v347 = vadd.f32 %v317, %v283
        %v348 = vadd.f32 %v317, %v284
        %v349 = vadd.f32 %v317, %v285
        %v350 = vadd.f32 %v317, %v286
        %v351 = vadd.f32 %v321, %v287
        %v352 = vadd.f32 %v321, %v288
        %v353 = vadd.f32 %v321, %v289
        %v354 = vadd.f32 %v321, %v290
        %v355 = vadd.f32 %v325, %v291
        %v356 = vadd.f32 %v325, %v292
        %v357 = vadd.f32 %v325, %v293
        %v358 = vadd.f32 %v325, %v294
        %v359 = vadd.f32 %v329, %v295
        %v360 = vadd.f32 %v329, %v296
        %v361 = vadd.f32 %v329, %v297
        %v362 = vadd.f32 %v329, %v298
        %v363 = vadd.f32 %v333, %v299
        %v364 = vadd.f32 %v333, %v300
        %v365 = vadd.f32 %v333, %v301
        %v366 = vadd.f32 %v333, %v302
        %v367 = vadd.f32 %v337, %v303
        %v368 = vadd.f32 %v337, %v304
        %v369 = vadd.f32 %v337, %v305
        %v370 = vadd.f32 %v337, %v306
        %371 = vset.pattern.permute.xlu0 1
        %372 = vperm.xlu0 %371, %v186
        %v373 = vpop.permute.xlu0 %372
        %375 = vset.pattern.permute.xlu0 1
        %376 = vperm.xlu0 %375, %v187
        %v377 = vpop.permute.xlu0 %376
        %379 = vset.pattern.permute.xlu0 1
        %380 = vperm.xlu0 %379, %v188
        %v381 = vpop.permute.xlu0 %380
        %383 = vset.pattern.permute.xlu0 1
        %384 = vperm.xlu0 %383, %v189
        %v385 = vpop.permute.xlu0 %384
        %387 = vset.pattern.permute.xlu0 1
        %388 = vperm.xlu0 %387, %v190
        %v389 = vpop.permute.xlu0 %388
        %391 = vset.pattern.permute.xlu0 1
        %392 = vperm.xlu0 %391, %v191
        %v393 = vpop.permute.xlu0 %392
        %395 = vset.pattern.permute.xlu0 1
        %396 = vperm.xlu0 %395, %v192
        %v397 = vpop.permute.xlu0 %396
        %399 = vset.pattern.permute.xlu0 1
        %400 = vperm.xlu0 %399, %v193
        %v401 = vpop.permute.xlu0 %400
        %v403 = vlaneseq
        %v404 = vshrl.u32 %v403, 7
        %v405 = vsub.s32 1, %v404
        %v406 = vrot.slane %v215, %v405
        %v407 = vlaneseq
        %v408 = vshrl.u32 %v407, 7
        %v409 = vsub.s32 1, %v408
        %v410 = vrot.slane %v216, %v409
        %v411 = vlaneseq
        %v412 = vshrl.u32 %v411, 7
        %v413 = vsub.s32 1, %v412
        %v414 = vrot.slane %v217, %v413
        %v415 = vlaneseq
        %v416 = vshrl.u32 %v415, 7
        %v417 = vsub.s32 1, %v416
        %v418 = vrot.slane %v218, %v417
        %v419 = vmul.f32 %v373, %v406
        %v420 = vmul.f32 %v373, %v410
        %v421 = vmul.f32 %v373, %v414
        %v422 = vmul.f32 %v373, %v418
        %v423 = vmul.f32 %v377, %v406
        %v424 = vmul.f32 %v377, %v410
        %v425 = vmul.f32 %v377, %v414
        %v426 = vmul.f32 %v377, %v418
        %v427 = vmul.f32 %v381, %v406
        %v428 = vmul.f32 %v381, %v410
        %v429 = vmul.f32 %v381, %v414
        %v430 = vmul.f32 %v381, %v418
        %v431 = vmul.f32 %v385, %v406
        %v432 = vmul.f32 %v385, %v410
        %v433 = vmul.f32 %v385, %v414
        %v434 = vmul.f32 %v385, %v418
        %v435 = vmul.f32 %v389, %v406
        %v436 = vmul.f32 %v389, %v410
        %v437 = vmul.f32 %v389, %v414
        %v438 = vmul.f32 %v389, %v418
        %v439 = vmul.f32 %v393, %v406
        %v440 = vmul.f32 %v393, %v410
        %v441 = vmul.f32 %v393, %v414
        %v442 = vmul.f32 %v393, %v418
        %v443 = vmul.f32 %v397, %v406
        %v444 = vmul.f32 %v397, %v410
        %v445 = vmul.f32 %v397, %v414
        %v446 = vmul.f32 %v397, %v418
        %v447 = vmul.f32 %v401, %v406
        %v448 = vmul.f32 %v401, %v410
        %v449 = vmul.f32 %v401, %v414
        %v450 = vmul.f32 %v401, %v418
        %v451 = vadd.f32 %v339, %v419
        %v452 = vadd.f32 %v340, %v420
        %v453 = vadd.f32 %v341, %v421
        %v454 = vadd.f32 %v342, %v422
        %v455 = vadd.f32 %v343, %v423
        %v456 = vadd.f32 %v344, %v424
        %v457 = vadd.f32 %v345, %v425
        %v458 = vadd.f32 %v346, %v426
        %v459 = vadd.f32 %v347, %v427
        %v460 = vadd.f32 %v348, %v428
        %v461 = vadd.f32 %v349, %v429
        %v462 = vadd.f32 %v350, %v430
        %v463 = vadd.f32 %v351, %v431
        %v464 = vadd.f32 %v352, %v432
        %v465 = vadd.f32 %v353, %v433
        %v466 = vadd.f32 %v354, %v434
        %v467 = vadd.f32 %v355, %v435
        %v468 = vadd.f32 %v356, %v436
        %v469 = vadd.f32 %v357, %v437
        %v470 = vadd.f32 %v358, %v438
        %v471 = vadd.f32 %v359, %v439
        %v472 = vadd.f32 %v360, %v440
        %v473 = vadd.f32 %v361, %v441
        %v474 = vadd.f32 %v362, %v442
        %v475 = vadd.f32 %v363, %v443
        %v476 = vadd.f32 %v364, %v444
        %v477 = vadd.f32 %v365, %v445
        %v478 = vadd.f32 %v366, %v446
        %v479 = vadd.f32 %v367, %v447
        %v480 = vadd.f32 %v368, %v448
        %v481 = vadd.f32 %v369, %v449
        %v482 = vadd.f32 %v370, %v450
        %483 = vset.pattern.permute.xlu0 2
        %484 = vperm.xlu0 %483, %v186
        %v485 = vpop.permute.xlu0 %484
        %487 = vset.pattern.permute.xlu0 2
        %488 = vperm.xlu0 %487, %v187
        %v489 = vpop.permute.xlu0 %488
        %491 = vset.pattern.permute.xlu0 2
        %492 = vperm.xlu0 %491, %v188
        %v493 = vpop.permute.xlu0 %492
        %495 = vset.pattern.permute.xlu0 2
        %496 = vperm.xlu0 %495, %v189
        %v497 = vpop.permute.xlu0 %496
        %499 = vset.pattern.permute.xlu0 2
        %500 = vperm.xlu0 %499, %v190
        %v501 = vpop.permute.xlu0 %500
        %503 = vset.pattern.permute.xlu0 2
        %504 = vperm.xlu0 %503, %v191
        %v505 = vpop.permute.xlu0 %504
        %507 = vset.pattern.permute.xlu0 2
        %508 = vperm.xlu0 %507, %v192
        %v509 = vpop.permute.xlu0 %508
        %511 = vset.pattern.permute.xlu0 2
        %512 = vperm.xlu0 %511, %v193
        %v513 = vpop.permute.xlu0 %512
        %v515 = vlaneseq
        %v516 = vshrl.u32 %v515, 7
        %v517 = vsub.s32 2, %v516
        %v518 = vrot.slane %v215, %v517
        %v519 = vlaneseq
        %v520 = vshrl.u32 %v519, 7
        %v521 = vsub.s32 2, %v520
        %v522 = vrot.slane %v216, %v521
        %v523 = vlaneseq
        %v524 = vshrl.u32 %v523, 7
        %v525 = vsub.s32 2, %v524
        %v526 = vrot.slane %v217, %v525
        %v527 = vlaneseq
        %v528 = vshrl.u32 %v527, 7
        %v529 = vsub.s32 2, %v528
        %v530 = vrot.slane %v218, %v529
        %v531 = vmul.f32 %v485, %v518
        %v532 = vmul.f32 %v485, %v522
        %v533 = vmul.f32 %v485, %v526
        %v534 = vmul.f32 %v485, %v530
        %v535 = vmul.f32 %v489, %v518
        %v536 = vmul.f32 %v489, %v522
        %v537 = vmul.f32 %v489, %v526
        %v538 = vmul.f32 %v489, %v530
        %v539 = vmul.f32 %v493, %v518
        %v540 = vmul.f32 %v493, %v522
        %v541 = vmul.f32 %v493, %v526
        %v542 = vmul.f32 %v493, %v530
        %v543 = vmul.f32 %v497, %v518
        %v544 = vmul.f32 %v497, %v522
        %v545 = vmul.f32 %v497, %v526
        %v546 = vmul.f32 %v497, %v530
        %v547 = vmul.f32 %v501, %v518
        %v548 = vmul.f32 %v501, %v522
        %v549 = vmul.f32 %v501, %v526
        %v550 = vmul.f32 %v501, %v530
        %v551 = vmul.f32 %v505, %v518
        %v552 = vmul.f32 %v505, %v522
        %v553 = vmul.f32 %v505, %v526
        %v554 = vmul.f32 %v505, %v530
        %v555 = vmul.f32 %v509, %v518
        %v556 = vmul.f32 %v509, %v522
        %v557 = vmul.f32 %v509, %v526
        %v558 = vmul.f32 %v509, %v530
        %v559 = vmul.f32 %v513, %v518
        %v560 = vmul.f32 %v513, %v522
        %v561 = vmul.f32 %v513, %v526
        %v562 = vmul.f32 %v513, %v530
        %v563 = vadd.f32 %v451, %v531
        %v564 = vadd.f32 %v452, %v532
        %v565 = vadd.f32 %v453, %v533
        %v566 = vadd.f32 %v454, %v534
        %v567 = vadd.f32 %v455, %v535
        %v568 = vadd.f32 %v456, %v536
        %v569 = vadd.f32 %v457, %v537
        %v570 = vadd.f32 %v458, %v538
        %v571 = vadd.f32 %v459, %v539
        %v572 = vadd.f32 %v460, %v540
        %v573 = vadd.f32 %v461, %v541
        %v574 = vadd.f32 %v462, %v542
        %v575 = vadd.f32 %v463, %v543
        %v576 = vadd.f32 %v464, %v544
        %v577 = vadd.f32 %v465, %v545
        %v578 = vadd.f32 %v466, %v546
        %v579 = vadd.f32 %v467, %v547
        %v580 = vadd.f32 %v468, %v548
        %v581 = vadd.f32 %v469, %v549
        %v582 = vadd.f32 %v470, %v550
        %v583 = vadd.f32 %v471, %v551
        %v584 = vadd.f32 %v472, %v552
        %v585 = vadd.f32 %v473, %v553
        %v586 = vadd.f32 %v474, %v554
        %v587 = vadd.f32 %v475, %v555
        %v588 = vadd.f32 %v476, %v556
        %v589 = vadd.f32 %v477, %v557
        %v590 = vadd.f32 %v478, %v558
        %v591 = vadd.f32 %v479, %v559
        %v592 = vadd.f32 %v480, %v560
        %v593 = vadd.f32 %v481, %v561
        %v594 = vadd.f32 %v482, %v562
        %595 = vset.pattern.permute.xlu0 3
        %596 = vperm.xlu0 %595, %v186
        %v597 = vpop.permute.xlu0 %596
        %599 = vset.pattern.permute.xlu0 3
        %600 = vperm.xlu0 %599, %v187
        %v601 = vpop.permute.xlu0 %600
        %603 = vset.pattern.permute.xlu0 3
        %604 = vperm.xlu0 %603, %v188
        %v605 = vpop.permute.xlu0 %604
        %607 = vset.pattern.permute.xlu0 3
        %608 = vperm.xlu0 %607, %v189
        %v609 = vpop.permute.xlu0 %608
        %611 = vset.pattern.permute.xlu0 3
        %612 = vperm.xlu0 %611, %v190
        %v613 = vpop.permute.xlu0 %612
        %615 = vset.pattern.permute.xlu0 3
        %616 = vperm.xlu0 %615, %v191
        %v617 = vpop.permute.xlu0 %616
        %619 = vset.pattern.permute.xlu0 3
        %620 = vperm.xlu0 %619, %v192
        %v621 = vpop.permute.xlu0 %620
        %623 = vset.pattern.permute.xlu0 3
        %624 = vperm.xlu0 %623, %v193
        %v625 = vpop.permute.xlu0 %624
        %v627 = vlaneseq
        %v628 = vshrl.u32 %v627, 7
        %v629 = vsub.s32 3, %v628
        %v630 = vrot.slane %v215, %v629
        %v631 = vlaneseq
        %v632 = vshrl.u32 %v631, 7
        %v633 = vsub.s32 3, %v632
        %v634 = vrot.slane %v216, %v633
        %v635 = vlaneseq
        %v636 = vshrl.u32 %v635, 7
        %v637 = vsub.s32 3, %v636
        %v638 = vrot.slane %v217, %v637
        %v639 = vlaneseq
        %v640 = vshrl.u32 %v639, 7
        %v641 = vsub.s32 3, %v640
        %v642 = vrot.slane %v218, %v641
        %v643 = vmul.f32 %v597, %v630
        %v644 = vmul.f32 %v597, %v634
        %v645 = vmul.f32 %v597, %v638
        %v646 = vmul.f32 %v597, %v642
        %v647 = vmul.f32 %v601, %v630
        %v648 = vmul.f32 %v601, %v634
        %v649 = vmul.f32 %v601, %v638
        %v650 = vmul.f32 %v601, %v642
        %v651 = vmul.f32 %v605, %v630
        %v652 = vmul.f32 %v605, %v634
        %v653 = vmul.f32 %v605, %v638
        %v654 = vmul.f32 %v605, %v642
        %v655 = vmul.f32 %v609, %v630
        %v656 = vmul.f32 %v609, %v634
        %v657 = vmul.f32 %v609, %v638
        %v658 = vmul.f32 %v609, %v642
        %v659 = vmul.f32 %v613, %v630
        %v660 = vmul.f32 %v613, %v634
        %v661 = vmul.f32 %v613, %v638
        %v662 = vmul.f32 %v613, %v642
        %v663 = vmul.f32 %v617, %v630
        %v664 = vmul.f32 %v617, %v634
        %v665 = vmul.f32 %v617, %v638
        %v666 = vmul.f32 %v617, %v642
        %v667 = vmul.f32 %v621, %v630
        %v668 = vmul.f32 %v621, %v634
        %v669 = vmul.f32 %v621, %v638
        %v670 = vmul.f32 %v621, %v642
        %v671 = vmul.f32 %v625, %v630
        %v672 = vmul.f32 %v625, %v634
        %v673 = vmul.f32 %v625, %v638
        %v674 = vmul.f32 %v625, %v642
        %v675 = vadd.f32 %v563, %v643
        %v676 = vadd.f32 %v564, %v644
        %v677 = vadd.f32 %v565, %v645
        %v678 = vadd.f32 %v566, %v646
        %v679 = vadd.f32 %v567, %v647
        %v680 = vadd.f32 %v568, %v648
        %v681 = vadd.f32 %v569, %v649
        %v682 = vadd.f32 %v570, %v650
        %v683 = vadd.f32 %v571, %v651
        %v684 = vadd.f32 %v572, %v652
        %v685 = vadd.f32 %v573, %v653
        %v686 = vadd.f32 %v574, %v654
        %v687 = vadd.f32 %v575, %v655
        %v688 = vadd.f32 %v576, %v656
        %v689 = vadd.f32 %v577, %v657
        %v690 = vadd.f32 %v578, %v658
        %v691 = vadd.f32 %v579, %v659
        %v692 = vadd.f32 %v580, %v660
        %v693 = vadd.f32 %v581, %v661
        %v694 = vadd.f32 %v582, %v662
        %v695 = vadd.f32 %v583, %v663
        %v696 = vadd.f32 %v584, %v664
        %v697 = vadd.f32 %v585, %v665
        %v698 = vadd.f32 %v586, %v666
        %v699 = vadd.f32 %v587, %v667
        %v700 = vadd.f32 %v588, %v668
        %v701 = vadd.f32 %v589, %v669
        %v702 = vadd.f32 %v590, %v670
        %v703 = vadd.f32 %v591, %v671
        %v704 = vadd.f32 %v592, %v672
        %v705 = vadd.f32 %v593, %v673
        %v706 = vadd.f32 %v594, %v674
        %v707 = vmul.f32 %v675, 0.01
        %v708 = vmul.f32 %v676, 0.01
        %v709 = vmul.f32 %v677, 0.01
        %v710 = vmul.f32 %v678, 0.01
        %v711 = vmul.f32 %v679, 0.01
        %v712 = vmul.f32 %v680, 0.01
        %v713 = vmul.f32 %v681, 0.01
        %v714 = vmul.f32 %v682, 0.01
        %v715 = vmul.f32 %v683, 0.01
        %v716 = vmul.f32 %v684, 0.01
        %v717 = vmul.f32 %v685, 0.01
        %v718 = vmul.f32 %v686, 0.01
        %v719 = vmul.f32 %v687, 0.01
        %v720 = vmul.f32 %v688, 0.01
        %v721 = vmul.f32 %v689, 0.01
        %v722 = vmul.f32 %v690, 0.01
        %v723 = vmul.f32 %v691, 0.01
        %v724 = vmul.f32 %v692, 0.01
        %v725 = vmul.f32 %v693, 0.01
        %v726 = vmul.f32 %v694, 0.01
        %v727 = vmul.f32 %v695, 0.01
        %v728 = vmul.f32 %v696, 0.01
        %v729 = vmul.f32 %v697, 0.01
        %v730 = vmul.f32 %v698, 0.01
        %v731 = vmul.f32 %v699, 0.01
        %v732 = vmul.f32 %v700, 0.01
        %v733 = vmul.f32 %v701, 0.01
        %v734 = vmul.f32 %v702, 0.01
        %v735 = vmul.f32 %v703, 0.01
        %v736 = vmul.f32 %v704, 0.01
        %v737 = vmul.f32 %v705, 0.01
        %v738 = vmul.f32 %v706, 0.01
        %v739 = vmax.f32 %v675, %v707
        %v740 = vmax.f32 %v676, %v708
        %v741 = vmax.f32 %v677, %v709
        %v742 = vmax.f32 %v678, %v710
        %v743 = vmax.f32 %v679, %v711
        %v744 = vmax.f32 %v680, %v712
        %v745 = vmax.f32 %v681, %v713
        %v746 = vmax.f32 %v682, %v714
        %v747 = vmax.f32 %v683, %v715
        %v748 = vmax.f32 %v684, %v716
        %v749 = vmax.f32 %v685, %v717
        %v750 = vmax.f32 %v686, %v718
        %v751 = vmax.f32 %v687, %v719
        %v752 = vmax.f32 %v688, %v720
        %v753 = vmax.f32 %v689, %v721
        %v754 = vmax.f32 %v690, %v722
        %v755 = vmax.f32 %v691, %v723
        %v756 = vmax.f32 %v692, %v724
        %v757 = vmax.f32 %v693, %v725
        %v758 = vmax.f32 %v694, %v726
        %v759 = vmax.f32 %v695, %v727
        %v760 = vmax.f32 %v696, %v728
        %v761 = vmax.f32 %v697, %v729
        %v762 = vmax.f32 %v698, %v730
        %v763 = vmax.f32 %v699, %v731
        %v764 = vmax.f32 %v700, %v732
        %v765 = vmax.f32 %v701, %v733
        %v766 = vmax.f32 %v702, %v734
        %v767 = vmax.f32 %v703, %v735
        %v768 = vmax.f32 %v704, %v736
        %v769 = vmax.f32 %v705, %v737
        %v770 = vmax.f32 %v706, %v738
        %772 = vset.pattern.permute.xlu0 64
        %773 = vperm.xlu0 %772, %v195
        %v774 = vpop.permute.xlu0 %773
        %777 = vset.pattern.permute.xlu0 64
        %778 = vperm.xlu0 %777, %v196
        %v779 = vpop.permute.xlu0 %778
        %782 = vset.pattern.permute.xlu0 64
        %783 = vperm.xlu0 %782, %v197
        %v784 = vpop.permute.xlu0 %783
        %787 = vset.pattern.permute.xlu0 64
        %788 = vperm.xlu0 %787, %v198
        %v789 = vpop.permute.xlu0 %788
        %792 = vset.pattern.permute.xlu0 64
        %793 = vperm.xlu0 %792, %v199
        %v794 = vpop.permute.xlu0 %793
        %797 = vset.pattern.permute.xlu0 64
        %798 = vperm.xlu0 %797, %v200
        %v799 = vpop.permute.xlu0 %798
        %802 = vset.pattern.permute.xlu0 64
        %803 = vperm.xlu0 %802, %v201
        %v804 = vpop.permute.xlu0 %803
        %807 = vset.pattern.permute.xlu0 64
        %808 = vperm.xlu0 %807, %v202
        %v809 = vpop.permute.xlu0 %808
        %vm811 = vcmask 523264
        %v812 = vsel %vm811, %v195, 0
        %v814 = vsel %vm811, %v196, 0
        %v816 = vsel %vm811, %v197, 0
        %v818 = vsel %vm811, %v198, 0
        %v820 = vsel %vm811, %v199, 0
        %v822 = vsel %vm811, %v200, 0
        %v824 = vsel %vm811, %v201, 0
        %v826 = vsel %vm811, %v202, 0
        %828 = vmatprep.subr.mxu0 %v740
        %829 = vmatpush1.msra.mxu0 %v739
        %830 = vmatprep.subr.mxu0 %v744
        %831 = vmatpush1.msra.mxu0 %v743
        %832 = vmatprep.subr.mxu0 %v748
        %833 = vmatpush1.msra.mxu0 %v747
        %834 = vmatprep.subr.mxu0 %v752
        %835 = vmatpush1.msra.mxu0 %v751
        %836 = vmatprep.subr.mxu0 %v756
        %837 = vmatpush1.msra.mxu0 %v755
        %838 = vmatprep.subr.mxu0 %v760
        %839 = vmatpush1.msra.mxu0 %v759
        %840 = vmatprep.subr.mxu0 %v764
        %841 = vmatpush1.msra.mxu0 %v763
        %842 = vmatprep.subr.mxu0 %v768
        %843 = vmatpush1.msra.mxu0 %v767
        %844 = vmatprep.subr.mxu0 0.0
        %845 = vmatpush1.msra.mxu0 0.0
        %846 = vmatprep.subr.mxu0 0.0
        %847 = vmatpush1.msra.mxu0 0.0
        %848 = vmatprep.subr.mxu0 0.0
        %849 = vmatpush1.msra.mxu0 0.0
        %850 = vmatprep.subr.mxu0 0.0
        %851 = vmatpush1.msra.mxu0 0.0
        %852 = vmatprep.subr.mxu0 0.0
        %853 = vmatpush1.msra.mxu0 0.0
        %854 = vmatprep.subr.mxu0 0.0
        %855 = vmatpush1.msra.mxu0 0.0
        %856 = vmatprep.subr.mxu0 0.0
        %857 = vmatpush1.msra.mxu0 0.0
        %858 = vmatprep.subr.mxu0 0.0
        %859 = vmatpush1.msra.mxu0 0.0
        %860 = vmatprep.subr.mxu0 0.0
        %861 = vmatpush1.msra.mxu0 0.0
        %862 = vmatprep.subr.mxu0 0.0
        %863 = vmatpush1.msra.mxu0 0.0
        %864 = vmatprep.subr.mxu0 0.0
        %865 = vmatpush1.msra.mxu0 0.0
        %866 = vmatprep.subr.mxu0 0.0
        %867 = vmatpush1.msra.mxu0 0.0
        %868 = vmatprep.subr.mxu0 0.0
        %869 = vmatpush1.msra.mxu0 0.0
        %870 = vmatprep.subr.mxu0 0.0
        %871 = vmatpush1.msra.mxu0 0.0
        %872 = vmatprep.subr.mxu0 0.0
        %873 = vmatpush1.msra.mxu0 0.0
        %874 = vmatprep.subr.mxu0 0.0
        %875 = vmatpush1.msra.mxu0 0.0
        %876 = vmatprep.subr.mxu0 0.0
        %877 = vmatpush1.msra.mxu0 0.0
        %878 = vmatprep.subr.mxu0 0.0
        %879 = vmatpush1.msra.mxu0 0.0
        %880 = vmatprep.subr.mxu0 0.0
        %881 = vmatpush1.msra.mxu0 0.0
        %882 = vmatprep.subr.mxu0 0.0
        %883 = vmatpush1.msra.mxu0 0.0
        %884 = vmatprep.subr.mxu0 0.0
        %885 = vmatpush1.msra.mxu0 0.0
        %886 = vmatprep.subr.mxu0 0.0
        %887 = vmatpush1.msra.mxu0 0.0
        %888 = vmatprep.subr.mxu0 0.0
        %889 = vmatpush1.msra.mxu0 0.0
        %890 = vmatprep.subr.mxu0 0.0
        %891 = vmatpush1.msra.mxu0 0.0
        %892 = vmatprep.mubr.f32.mxu0 0.0
        %893 = vmatmul.mubr.f32.gmra.mrb[0].mxu0 %v812
        %v894 = vpop.f32.mrb[0].mxu0
        %v895 = vadd.f32 %v774, %v894
        %v896 = vpop.f32.mrb[0].mxu0
        %v897 = vadd.f32 %v774, %v896
        %898 = vmatprep.mubr.f32.mxu0 0.0
        %899 = vmatmul.mubr.f32.gmra.mrb[0].mxu0 %v814
        %v900 = vpop.f32.mrb[0].mxu0
        %v901 = vadd.f32 %v779, %v900
        %v902 = vpop.f32.mrb[0].mxu0
        %v903 = vadd.f32 %v779, %v902
        %904 = vmatprep.mubr.f32.mxu0 0.0
        %905 = vmatmul.mubr.f32.gmra.mrb[0].mxu0 %v816
        %v906 = vpop.f32.mrb[0].mxu0
        %v907 = vadd.f32 %v784, %v906
        %v908 = vpop.f32.mrb[0].mxu0
        %v909 = vadd.f32 %v784, %v908
        %910 = vmatprep.mubr.f32.mxu0 0.0
        %911 = vmatmul.mubr.f32.gmra.mrb[0].mxu0 %v818
        %v912 = vpop.f32.mrb[0].mxu0
        %v913 = vadd.f32 %v789, %v912
        %v914 = vpop.f32.mrb[0].mxu0
        %v915 = vadd.f32 %v789, %v914
        %916 = vmatprep.mubr.f32.mxu0 0.0
        %917 = vmatmul.mubr.f32.gmra.mrb[0].mxu0 %v820
        %v918 = vpop.f32.mrb[0].mxu0
        %v919 = vadd.f32 %v794, %v918
        %v920 = vpop.f32.mrb[0].mxu0
        %v921 = vadd.f32 %v794, %v920
        %922 = vmatprep.mubr.f32.mxu0 0.0
        %923 = vmatmul.mubr.f32.gmra.mrb[0].mxu0 %v822
        %v924 = vpop.f32.mrb[0].mxu0
        %v925 = vadd.f32 %v799, %v924
        %v926 = vpop.f32.mrb[0].mxu0
        %v927 = vadd.f32 %v799, %v926
        %928 = vmatprep.mubr.f32.mxu0 0.0
        %929 = vmatmul.mubr.f32.gmra.mrb[0].mxu0 %v824
        %v930 = vpop.f32.mrb[0].mxu0
        %v931 = vadd.f32 %v804, %v930
        %v932 = vpop.f32.mrb[0].mxu0
        %v933 = vadd.f32 %v804, %v932
        %934 = vmatprep.mubr.f32.mxu0 0.0
        %935 = vmatmul.mubr.f32.gmra.mrb[0].mxu0 %v826
        %v936 = vpop.f32.mrb[0].mxu0
        %v937 = vadd.f32 %v809, %v936
        %v938 = vpop.f32.mrb[0].mxu0
        %v939 = vadd.f32 %v809, %v938
        %940 = vdwg.mxu0
        %941 = vmatprep.subr.mxu0 %v742
        %942 = vmatpush1.msra.mxu0 %v741
        %943 = vmatprep.subr.mxu0 %v746
        %944 = vmatpush1.msra.mxu0 %v745
        %945 = vmatprep.subr.mxu0 %v750
        %946 = vmatpush1.msra.mxu0 %v749
        %947 = vmatprep.subr.mxu0 %v754
        %948 = vmatpush1.msra.mxu0 %v753
        %949 = vmatprep.subr.mxu0 %v758
        %950 = vmatpush1.msra.mxu0 %v757
        %951 = vmatprep.subr.mxu0 %v762
        %952 = vmatpush1.msra.mxu0 %v761
        %953 = vmatprep.subr.mxu0 %v766
        %954 = vmatpush1.msra.mxu0 %v765
        %955 = vmatprep.subr.mxu0 %v770
        %956 = vmatpush1.msra.mxu0 %v769
        %957 = vmatprep.subr.mxu0 0.0
        %958 = vmatpush1.msra.mxu0 0.0
        %959 = vmatprep.subr.mxu0 0.0
        %960 = vmatpush1.msra.mxu0 0.0
        %961 = vmatprep.subr.mxu0 0.0
        %962 = vmatpush1.msra.mxu0 0.0
        %963 = vmatprep.subr.mxu0 0.0
        %964 = vmatpush1.msra.mxu0 0.0
        %965 = vmatprep.subr.mxu0 0.0
        %966 = vmatpush1.msra.mxu0 0.0
        %967 = vmatprep.subr.mxu0 0.0
        %968 = vmatpush1.msra.mxu0 0.0
        %969 = vmatprep.subr.mxu0 0.0
        %970 = vmatpush1.msra.mxu0 0.0
        %971 = vmatprep.subr.mxu0 0.0
        %972 = vmatpush1.msra.mxu0 0.0
        %973 = vmatprep.subr.mxu0 0.0
        %974 = vmatpush1.msra.mxu0 0.0
        %975 = vmatprep.subr.mxu0 0.0
        %976 = vmatpush1.msra.mxu0 0.0
        %977 = vmatprep.subr.mxu0 0.0
        %978 = vmatpush1.msra.mxu0 0.0
        %979 = vmatprep.subr.mxu0 0.0
        %980 = vmatpush1.msra.mxu0 0.0
        %981 = vmatprep.subr.mxu0 0.0
        %982 = vmatpush1.msra.mxu0 0.0
        %983 = vmatprep.subr.mxu0 0.0
        %984 = vmatpush1.msra.mxu0 0.0
        %985 = vmatprep.subr.mxu0 0.0
        %986 = vmatpush1.msra.mxu0 0.0
        %987 = vmatprep.subr.mxu0 0.0
        %988 = vmatpush1.msra.mxu0 0.0
        %989 = vmatprep.subr.mxu0 0.0
        %990 = vmatpush1.msra.mxu0 0.0
        %991 = vmatprep.subr.mxu0 0.0
        %992 = vmatpush1.msra.mxu0 0.0
        %993 = vmatprep.subr.mxu0 0.0
        %994 = vmatpush1.msra.mxu0 0.0
        %995 = vmatprep.subr.mxu0 0.0
        %996 = vmatpush1.msra.mxu0 0.0
        %997 = vmatprep.subr.mxu0 0.0
        %998 = vmatpush1.msra.mxu0 0.0
        %999 = vmatprep.subr.mxu0 0.0
        %1000 = vmatpush1.msra.mxu0 0.0
        %1001 = vmatprep.subr.mxu0 0.0
        %1002 = vmatpush1.msra.mxu0 0.0
        %1003 = vmatprep.subr.mxu0 0.0
        %1004 = vmatpush1.msra.mxu0 0.0
        %1005 = vmatprep.mubr.f32.mxu0 0.0
        %1006 = vmatmul.mubr.f32.gmra.mrb[0].mxu0 %v812
        %v1007 = vpop.f32.mrb[0].mxu0
        %v1008 = vadd.f32 %v774, %v1007
        %v1009 = vpop.f32.mrb[0].mxu0
        %v1010 = vadd.f32 %v774, %v1009
        %1011 = vmatprep.mubr.f32.mxu0 0.0
        %1012 = vmatmul.mubr.f32.gmra.mrb[0].mxu0 %v814
        %v1013 = vpop.f32.mrb[0].mxu0
        %v1014 = vadd.f32 %v779, %v1013
        %v1015 = vpop.f32.mrb[0].mxu0
        %v1016 = vadd.f32 %v779, %v1015
        %1017 = vmatprep.mubr.f32.mxu0 0.0
        %1018 = vmatmul.mubr.f32.gmra.mrb[0].mxu0 %v816
        %v1019 = vpop.f32.mrb[0].mxu0
        %v1020 = vadd.f32 %v784, %v1019
        %v1021 = vpop.f32.mrb[0].mxu0
        %v1022 = vadd.f32 %v784, %v1021
        %1023 = vmatprep.mubr.f32.mxu0 0.0
        %1024 = vmatmul.mubr.f32.gmra.mrb[0].mxu0 %v818
        %v1025 = vpop.f32.mrb[0].mxu0
        %v1026 = vadd.f32 %v789, %v1025
        %v1027 = vpop.f32.mrb[0].mxu0
        %v1028 = vadd.f32 %v789, %v1027
        %1029 = vmatprep.mubr.f32.mxu0 0.0
        %1030 = vmatmul.mubr.f32.gmra.mrb[0].mxu0 %v820
        %v1031 = vpop.f32.mrb[0].mxu0
        %v1032 = vadd.f32 %v794, %v1031
        %v1033 = vpop.f32.mrb[0].mxu0
        %v1034 = vadd.f32 %v794, %v1033
        %1035 = vmatprep.mubr.f32.mxu0 0.0
        %1036 = vmatmul.mubr.f32.gmra.mrb[0].mxu0 %v822
        %v1037 = vpop.f32.mrb[0].mxu0
        %v1038 = vadd.f32 %v799, %v1037
        %v1039 = vpop.f32.mrb[0].mxu0
        %v1040 = vadd.f32 %v799, %v1039
        %1041 = vmatprep.mubr.f32.mxu0 0.0
        %1042 = vmatmul.mubr.f32.gmra.mrb[0].mxu0 %v824
        %v1043 = vpop.f32.mrb[0].mxu0
        %v1044 = vadd.f32 %v804, %v1043
        %v1045 = vpop.f32.mrb[0].mxu0
        %v1046 = vadd.f32 %v804, %v1045
        %1047 = vmatprep.mubr.f32.mxu0 0.0
        %1048 = vmatmul.mubr.f32.gmra.mrb[0].mxu0 %v826
        %v1049 = vpop.f32.mrb[0].mxu0
        %v1050 = vadd.f32 %v809, %v1049
        %v1051 = vpop.f32.mrb[0].mxu0
        %v1052 = vadd.f32 %v809, %v1051
        %1053 = vdwg.mxu0
        %v1054 = vmul.f32 %v895, 0.01
        %v1055 = vmul.f32 %v897, 0.01
        %v1056 = vmul.f32 %v1008, 0.01
        %v1057 = vmul.f32 %v1010, 0.01
        %v1058 = vmul.f32 %v901, 0.01
        %v1059 = vmul.f32 %v903, 0.01
        %v1060 = vmul.f32 %v1014, 0.01
        %v1061 = vmul.f32 %v1016, 0.01
        %v1062 = vmul.f32 %v907, 0.01
        %v1063 = vmul.f32 %v909, 0.01
        %v1064 = vmul.f32 %v1020, 0.01
        %v1065 = vmul.f32 %v1022, 0.01
        %v1066 = vmul.f32 %v913, 0.01
        %v1067 = vmul.f32 %v915, 0.01
        %v1068 = vmul.f32 %v1026, 0.01
        %v1069 = vmul.f32 %v1028, 0.01
        %v1070 = vmul.f32 %v919, 0.01
        %v1071 = vmul.f32 %v921, 0.01
        %v1072 = vmul.f32 %v1032, 0.01
        %v1073 = vmul.f32 %v1034, 0.01
        %v1074 = vmul.f32 %v925, 0.01
        %v1075 = vmul.f32 %v927, 0.01
        %v1076 = vmul.f32 %v1038, 0.01
        %v1077 = vmul.f32 %v1040, 0.01
        %v1078 = vmul.f32 %v931, 0.01
        %v1079 = vmul.f32 %v933, 0.01
        %v1080 = vmul.f32 %v1044, 0.01
        %v1081 = vmul.f32 %v1046, 0.01
        %v1082 = vmul.f32 %v937, 0.01
        %v1083 = vmul.f32 %v939, 0.01
        %v1084 = vmul.f32 %v1050, 0.01
        %v1085 = vmul.f32 %v1052, 0.01
        %v1086 = vmax.f32 %v895, %v1054
        %v1087 = vmax.f32 %v897, %v1055
        %v1088 = vmax.f32 %v1008, %v1056
        %v1089 = vmax.f32 %v1010, %v1057
        %v1090 = vmax.f32 %v901, %v1058
        %v1091 = vmax.f32 %v903, %v1059
        %v1092 = vmax.f32 %v1014, %v1060
        %v1093 = vmax.f32 %v1016, %v1061
        %v1094 = vmax.f32 %v907, %v1062
        %v1095 = vmax.f32 %v909, %v1063
        %v1096 = vmax.f32 %v1020, %v1064
        %v1097 = vmax.f32 %v1022, %v1065
        %v1098 = vmax.f32 %v913, %v1066
        %v1099 = vmax.f32 %v915, %v1067
        %v1100 = vmax.f32 %v1026, %v1068
        %v1101 = vmax.f32 %v1028, %v1069
        %v1102 = vmax.f32 %v919, %v1070
        %v1103 = vmax.f32 %v921, %v1071
        %v1104 = vmax.f32 %v1032, %v1072
        %v1105 = vmax.f32 %v1034, %v1073
        %v1106 = vmax.f32 %v925, %v1074
        %v1107 = vmax.f32 %v927, %v1075
        %v1108 = vmax.f32 %v1038, %v1076
        %v1109 = vmax.f32 %v1040, %v1077
        %v1110 = vmax.f32 %v931, %v1078
        %v1111 = vmax.f32 %v933, %v1079
        %v1112 = vmax.f32 %v1044, %v1080
        %v1113 = vmax.f32 %v1046, %v1081
        %v1114 = vmax.f32 %v937, %v1082
        %v1115 = vmax.f32 %v939, %v1083
        %v1116 = vmax.f32 %v1050, %v1084
        %v1117 = vmax.f32 %v1052, %v1085
        %1119 = vset.pattern.permute.xlu0 64
        %1120 = vperm.xlu0 %1119, %v203
        %v1121 = vpop.permute.xlu0 %1120
        %v1123 = vsel %vm811, %v203, 0
        %1125 = vmatprep.subr.mxu0 %v1087
        %1126 = vmatpush1.msra.mxu0 %v1086
        %1127 = vmatprep.subr.mxu0 %v1091
        %1128 = vmatpush1.msra.mxu0 %v1090
        %1129 = vmatprep.subr.mxu0 %v1095
        %1130 = vmatpush1.msra.mxu0 %v1094
        %1131 = vmatprep.subr.mxu0 %v1099
        %1132 = vmatpush1.msra.mxu0 %v1098
        %1133 = vmatprep.subr.mxu0 %v1103
        %1134 = vmatpush1.msra.mxu0 %v1102
        %1135 = vmatprep.subr.mxu0 %v1107
        %1136 = vmatpush1.msra.mxu0 %v1106
        %1137 = vmatprep.subr.mxu0 %v1111
        %1138 = vmatpush1.msra.mxu0 %v1110
        %1139 = vmatprep.subr.mxu0 %v1115
        %1140 = vmatpush1.msra.mxu0 %v1114
        %1141 = vmatprep.subr.mxu0 0.0
        %1142 = vmatpush1.msra.mxu0 0.0
        %1143 = vmatprep.subr.mxu0 0.0
        %1144 = vmatpush1.msra.mxu0 0.0
        %1145 = vmatprep.subr.mxu0 0.0
        %1146 = vmatpush1.msra.mxu0 0.0
        %1147 = vmatprep.subr.mxu0 0.0
        %1148 = vmatpush1.msra.mxu0 0.0
        %1149 = vmatprep.subr.mxu0 0.0
        %1150 = vmatpush1.msra.mxu0 0.0
        %1151 = vmatprep.subr.mxu0 0.0
        %1152 = vmatpush1.msra.mxu0 0.0
        %1153 = vmatprep.subr.mxu0 0.0
        %1154 = vmatpush1.msra.mxu0 0.0
        %1155 = vmatprep.subr.mxu0 0.0
        %1156 = vmatpush1.msra.mxu0 0.0
        %1157 = vmatprep.subr.mxu0 0.0
        %1158 = vmatpush1.msra.mxu0 0.0
        %1159 = vmatprep.subr.mxu0 0.0
        %1160 = vmatpush1.msra.mxu0 0.0
        %1161 = vmatprep.subr.mxu0 0.0
        %1162 = vmatpush1.msra.mxu0 0.0
        %1163 = vmatprep.subr.mxu0 0.0
        %1164 = vmatpush1.msra.mxu0 0.0
        %1165 = vmatprep.subr.mxu0 0.0
        %1166 = vmatpush1.msra.mxu0 0.0
        %1167 = vmatprep.subr.mxu0 0.0
        %1168 = vmatpush1.msra.mxu0 0.0
        %1169 = vmatprep.subr.mxu0 0.0
        %1170 = vmatpush1.msra.mxu0 0.0
        %1171 = vmatprep.subr.mxu0 0.0
        %1172 = vmatpush1.msra.mxu0 0.0
        %1173 = vmatprep.subr.mxu0 0.0
        %1174 = vmatpush1.msra.mxu0 0.0
        %1175 = vmatprep.subr.mxu0 0.0
        %1176 = vmatpush1.msra.mxu0 0.0
        %1177 = vmatprep.subr.mxu0 0.0
        %1178 = vmatpush1.msra.mxu0 0.0
        %1179 = vmatprep.subr.mxu0 0.0
        %1180 = vmatpush1.msra.mxu0 0.0
        %1181 = vmatprep.subr.mxu0 0.0
        %1182 = vmatpush1.msra.mxu0 0.0
        %1183 = vmatprep.subr.mxu0 0.0
        %1184 = vmatpush1.msra.mxu0 0.0
        %1185 = vmatprep.subr.mxu0 0.0
        %1186 = vmatpush1.msra.mxu0 0.0
        %1187 = vmatprep.subr.mxu0 0.0
        %1188 = vmatpush1.msra.mxu0 0.0
        %1189 = vmatprep.mubr.f32.mxu0 0.0
        %1190 = vmatmul.mubr.f32.gmra.mrb[0].mxu0 %v1123
        %v1191 = vpop.f32.mrb[0].mxu0
        %v1192 = vadd.f32 %v1121, %v1191
        %v1193 = vpop.f32.mrb[0].mxu0
        %v1194 = vadd.f32 %v1121, %v1193
        %1195 = vdwg.mxu0
        %1196 = vmatprep.subr.mxu0 %v1089
        %1197 = vmatpush1.msra.mxu0 %v1088
        %1198 = vmatprep.subr.mxu0 %v1093
        %1199 = vmatpush1.msra.mxu0 %v1092
        %1200 = vmatprep.subr.mxu0 %v1097
        %1201 = vmatpush1.msra.mxu0 %v1096
        %1202 = vmatprep.subr.mxu0 %v1101
        %1203 = vmatpush1.msra.mxu0 %v1100
        %1204 = vmatprep.subr.mxu0 %v1105
        %1205 = vmatpush1.msra.mxu0 %v1104
        %1206 = vmatprep.subr.mxu0 %v1109
        %1207 = vmatpush1.msra.mxu0 %v1108
        %1208 = vmatprep.subr.mxu0 %v1113
        %1209 = vmatpush1.msra.mxu0 %v1112
        %1210 = vmatprep.subr.mxu0 %v1117
        %1211 = vmatpush1.msra.mxu0 %v1116
        %1212 = vmatprep.subr.mxu0 0.0
        %1213 = vmatpush1.msra.mxu0 0.0
        %1214 = vmatprep.subr.mxu0 0.0
        %1215 = vmatpush1.msra.mxu0 0.0
        %1216 = vmatprep.subr.mxu0 0.0
        %1217 = vmatpush1.msra.mxu0 0.0
        %1218 = vmatprep.subr.mxu0 0.0
        %1219 = vmatpush1.msra.mxu0 0.0
        %1220 = vmatprep.subr.mxu0 0.0
        %1221 = vmatpush1.msra.mxu0 0.0
        %1222 = vmatprep.subr.mxu0 0.0
        %1223 = vmatpush1.msra.mxu0 0.0
        %1224 = vmatprep.subr.mxu0 0.0
        %1225 = vmatpush1.msra.mxu0 0.0
        %1226 = vmatprep.subr.mxu0 0.0
        %1227 = vmatpush1.msra.mxu0 0.0
        %1228 = vmatprep.subr.mxu0 0.0
        %1229 = vmatpush1.msra.mxu0 0.0
        %1230 = vmatprep.subr.mxu0 0.0
        %1231 = vmatpush1.msra.mxu0 0.0
        %1232 = vmatprep.subr.mxu0 0.0
        %1233 = vmatpush1.msra.mxu0 0.0
        %1234 = vmatprep.subr.mxu0 0.0
        %1235 = vmatpush1.msra.mxu0 0.0
        %1236 = vmatprep.subr.mxu0 0.0
        %1237 = vmatpush1.msra.mxu0 0.0
        %1238 = vmatprep.subr.mxu0 0.0
        %1239 = vmatpush1.msra.mxu0 0.0
        %1240 = vmatprep.subr.mxu0 0.0
        %1241 = vmatpush1.msra.mxu0 0.0
        %1242 = vmatprep.subr.mxu0 0.0
        %1243 = vmatpush1.msra.mxu0 0.0
        %1244 = vmatprep.subr.mxu0 0.0
        %1245 = vmatpush1.msra.mxu0 0.0
        %1246 = vmatprep.subr.mxu0 0.0
        %1247 = vmatpush1.msra.mxu0 0.0
        %1248 = vmatprep.subr.mxu0 0.0
        %1249 = vmatpush1.msra.mxu0 0.0
        %1250 = vmatprep.subr.mxu0 0.0
        %1251 = vmatpush1.msra.mxu0 0.0
        %1252 = vmatprep.subr.mxu0 0.0
        %1253 = vmatpush1.msra.mxu0 0.0
        %1254 = vmatprep.subr.mxu0 0.0
        %1255 = vmatpush1.msra.mxu0 0.0
        %1256 = vmatprep.subr.mxu0 0.0
        %1257 = vmatpush1.msra.mxu0 0.0
        %1258 = vmatprep.subr.mxu0 0.0
        %1259 = vmatpush1.msra.mxu0 0.0
        %1260 = vmatprep.mubr.f32.mxu0 0.0
        %1261 = vmatmul.mubr.f32.gmra.mrb[0].mxu0 %v1123
        %v1262 = vpop.f32.mrb[0].mxu0
        %v1263 = vadd.f32 %v1121, %v1262
        %v1264 = vpop.f32.mrb[0].mxu0
        %v1265 = vadd.f32 %v1121, %v1264
        %1266 = vdwg.mxu0
        %vm1267 = vweird.f32 %v1192
        %vm1268 = vweird.f32 %v1194
        %vm1269 = vweird.f32 %v1263
        %vm1270 = vweird.f32 %v1265
        %vm1271 = vmxor %vm1267, 1
        %vm1272 = vmxor %vm1268, 1
        %vm1273 = vmxor %vm1269, 1
        %vm1274 = vmxor %vm1270, 1
        %v1275 = vsel %vm1271, %v1192, nan
        %v1276 = vsel %vm1272, %v1194, nan
        %v1277 = vsel %vm1273, %v1263, nan
        %v1278 = vsel %vm1274, %v1265, nan
        %v1279 = vsub.f32 1.0, %v194
        %v1280 = vmul.f32 %v1275, 1.442695
        %v1281 = vpow.pop %v1280
        %v1282 = vmul.f32 %v1276, 1.442695
        %v1283 = vpow.pop %v1282
        %v1284 = vmul.f32 %v1277, 1.442695
        %v1285 = vpow.pop %v1284
        %v1286 = vmul.f32 %v1278, 1.442695
        %v1287 = vpow.pop %v1286
        %v1292 = vcombine.low %v1281, %v1283
        %v1293 = vcombine.low %v1285, %v1287
        %v1296 = vmul.f32 %v184, %v1292
        %v1297 = vmul.f32 %v185, %v1293
        %v1302 = vcombine.high %v1275, %v1276
        %v1303 = vcombine.high %v1277, %v1278
        %v1306 = vadd.f32 %v1296, %v1302
        %v1307 = vadd.f32 %v1297, %v1303
        %1309 = vset.pattern.permute.xlu0 5
        %1310 = vperm.xlu0 %1309, %v1279
        %v1311 = vpop.permute.xlu0 %1310
        %v1315 = vcombine.high %v1306, %v1306
        %v1316 = vcombine.high %v1307, %v1307
        %v1319 = vmul.f32 %v1311, %v1306
        %v1320 = vmul.f32 %v1311, %v1315
        %v1321 = vmul.f32 %v1311, %v1307
        %v1322 = vmul.f32 %v1311, %v1316
        %v1323 = vadd.f32 %v215, %v1319
        %v1324 = vadd.f32 %v216, %v1320
        %v1325 = vadd.f32 %v217, %v1321
        %v1326 = vadd.f32 %v218, %v1322
        %v1331 = vcombine.low %v1323, %v1324
        %v1332 = vcombine.low %v1325, %v1326
        %1335 = vst [vmem:[%s168] sm:$0xff] %v1331
        %1336 = vst [vmem:[%s168 + $0x8] sm:$0xff] %v1332
        %v1337 = vmul.f32 %v1311, %v1275
        %v1338 = vmul.f32 %v1311, %v1276
        %v1339 = vmul.f32 %v1311, %v1277
        %v1340 = vmul.f32 %v1311, %v1278
        %vm1341 = vcmask 1043456
        %v1342 = vsel %vm1341, %v1337, 0.0
        %v1343 = vrot.slane %v1342, 4
        %v1344 = vadd.f32 %v1342, %v1343
        %v1345 = vrot.slane %v1344, 2
        %v1346 = vadd.f32 %v1344, %v1345
        %v1347 = vrot.slane %v1346, 1
        %v1348 = vadd.f32 %v1346, %v1347
        %v1349 = vsel %vm1341, %v1338, 0.0
        %v1350 = vrot.slane %v1349, 4
        %v1351 = vadd.f32 %v1349, %v1350
        %v1352 = vrot.slane %v1351, 2
        %v1353 = vadd.f32 %v1351, %v1352
        %v1354 = vrot.slane %v1353, 1
        %v1355 = vadd.f32 %v1353, %v1354
        %v1356 = vsel %vm1341, %v1339, 0.0
        %v1357 = vrot.slane %v1356, 4
        %v1358 = vadd.f32 %v1356, %v1357
        %v1359 = vrot.slane %v1358, 2
        %v1360 = vadd.f32 %v1358, %v1359
        %v1361 = vrot.slane %v1360, 1
        %v1362 = vadd.f32 %v1360, %v1361
        %v1363 = vsel %vm1341, %v1340, 0.0
        %v1364 = vrot.slane %v1363, 4
        %v1365 = vadd.f32 %v1363, %v1364
        %v1366 = vrot.slane %v1365, 2
        %v1367 = vadd.f32 %v1365, %v1366
        %v1368 = vrot.slane %v1367, 1
        %v1369 = vadd.f32 %v1367, %v1368
        %v1374 = vcombine.low %v1348, %v1355
        %v1375 = vcombine.low %v1362, %v1369
        %v1377 = vunpack.c.l.s4 1966171168
        %v1378 = vunpack.c.0.s8 %v1377
        %v1379 = vlaneseq
        %v1380 = vshrl.u32 %v1379, 7
        %v1381 = vsub.s32 %v1378, %v1380
        %v1382 = vrot.slane %v1374, %v1381
        %v1384 = vunpack.c.l.s4 1966171168
        %v1385 = vunpack.c.0.s8 %v1384
        %v1386 = vlaneseq
        %v1387 = vshrl.u32 %v1386, 7
        %v1388 = vsub.s32 %v1385, %v1387
        %v1389 = vrot.slane %v1375, %v1388
        %v1390 = vcombine.low %v1382, %v1389
        %v1392 = vunpack.c.l.s4 1966171168
        %v1393 = vunpack.c.0.s8 %v1392
        %v1394 = vlaneseq
        %v1395 = vshrl.u32 %v1394, 7
        %v1396 = vsub.s32 %v1393, %v1395
        %v1397 = vrot.slane %v1390, %v1396
        %v1399 = vlaneseq
        %vm1400 = vcmp.ge.s32.totalorder %v1399, 0
        %vm1401 = vcmp.lt.s32.totalorder %v1399, 512
        %vm1402 = vmand %vm1400, %vm1401
        %1403 = vst.msk [vmem:[%s175] sm:$0xf] %vm1402, %v1397
        %s1404 = sand.u32 %s76, 1
        %s1405 = scalar_lea.sflag [#allocation3], %s1404
        %s1406 = sand.u32 %s76, 1
        %s1407 = smul.addr %s1406, 16
        %s1408 = scalar_lea.vmem [#allocation2], %s1407
        %s1409 = sand.u32 %s102, 1
        %s1410 = scalar_lea.sflag [#allocation5], %s1409
        %s1411 = sand.u32 %s102, 1
        %s1412 = smul.addr %s1411, 4
        %s1413 = scalar_lea.vmem [#allocation4], %s1412
        // Predicated region
        $region29: #{masked_affine_flow_forward.1} parent=27 // pred_check
          %p1414 = pneg %p86
        $region30: #{masked_affine_flow_forward.1} parent=27 // pred_check_branch
          %1416 = sbr.rel (%p1414) target = $region32
        $region31: #{masked_affine_flow_forward.1} parent=27 // pred_region
          %s1417 = smul.u32 4, %s21
          %s1419 = ssub.s32 256, 256
          %1420 = vsyncadd %s1405, %s1419
          %s1421 = smul.addr %s1417, 64
          %s1422 = scalar_lea.hbm %s2, %s1421
          %s1424 = sshll.u32 %s1408, 4
          %s1425 = int_to_ptr.vmem [resolvable:$true] %s1424
          %1427 = dma.vmem_to_hbm [thread:$0]  %s1425, 256, %s1422, %s1405
        $region32: #{masked_affine_flow_forward.1} parent=27 // pred_fallthru
          _
        // Predicated region
        $region33: #{masked_affine_flow_forward.1} parent=27 // pred_check
          %p1428 = pneg %p112
        $region34: #{masked_affine_flow_forward.1} parent=27 // pred_check_branch
          %1430 = sbr.rel (%p1428) target = $region36
        $region35: #{masked_affine_flow_forward.1} parent=27 // pred_region
          %s1431 = smul.u32 4, %s21
          %s1433 = ssub.s32 64, 64
          %1434 = vsyncadd %s1410, %s1433
          %s1435 = smul.addr %s1431, 16
          %s1436 = scalar_lea.hbm %s3, %s1435
          %s1438 = sshll.u32 %s1413, 4
          %s1439 = int_to_ptr.vmem [resolvable:$true] %s1438
          %1441 = dma.vmem_to_hbm [thread:$0]  %s1439, 64, %s1436, %s1410
        $region36: #{masked_affine_flow_forward.1} parent=27 // pred_fallthru
          _
      $region28: #{masked_affine_flow_forward.1} parent=5 // pred_fallthru
        _
      %p1442 = scmp.le.s32.totalorder 2, %s16
      // Predicated region
      $region37: #{masked_affine_flow_forward.1} parent=5 // pred_check
        %p1443 = pneg %p1442
      $region38: #{masked_affine_flow_forward.1} parent=5 // pred_check_branch
        %1445 = sbr.rel (%p1443) target = $region40
      $region39: #{masked_affine_flow_forward.1} parent=5 // pred_region
        %s1446 = ssub.s32 %s16, 2
        // Predicated region
        $region41: #{masked_affine_flow_forward.1} parent=39 // pred_check
          %p1447 = pneg %p92
        $region42: #{masked_affine_flow_forward.1} parent=39 // pred_check_branch
          %1449 = sbr.rel (%p1447) target = $region44
        $region43: #{masked_affine_flow_forward.1} parent=39 // pred_region
          %s1450 = sand.u32 %s77, 1
          %s1451 = scalar_lea.sflag [#allocation3], %s1450
          %s1452 = sand.u32 %s77, 1
          %s1453 = smul.addr %s1452, 16
          %s1454 = scalar_lea.vmem [#allocation2], %s1453
          %1455 = dma.done %s1451, 256
        $region44: #{masked_affine_flow_forward.1} parent=39 // pred_fallthru
          _
        // Predicated region
        $region45: #{masked_affine_flow_forward.1} parent=39 // pred_check
          %p1456 = pneg %p118
        $region46: #{masked_affine_flow_forward.1} parent=39 // pred_check_branch
          %1458 = sbr.rel (%p1456) target = $region48
        $region47: #{masked_affine_flow_forward.1} parent=39 // pred_region
          %s1459 = sand.u32 %s103, 1
          %s1460 = scalar_lea.sflag [#allocation5], %s1459
          %s1461 = sand.u32 %s103, 1
          %s1462 = smul.addr %s1461, 4
          %s1463 = scalar_lea.vmem [#allocation4], %s1462
          %1464 = dma.done %s1460, 64
        $region48: #{masked_affine_flow_forward.1} parent=39 // pred_fallthru
          _
      $region40: #{masked_affine_flow_forward.1} parent=5 // pred_fallthru
        _
    $region6: #{masked_affine_flow_forward.1} parent=1 // loop_footer
      %s20 = sadd.s32 1, %s16
    $region7: #{masked_affine_flow_forward.1} parent=1 // loop_footer_branch
      %15 = sbr.rel target = $region3
    $region8: #{masked_affine_flow_forward.1} parent=1 // loop_exit
      _
    %1465 = vsyncpa [#allocation3], 1
    %s1466 = scalar_lea.sflag [#allocation3], 1
    %1467 = vsyncpa %s1466, 1
    %1468 = vsyncpa [#allocation5], 1
    %s1469 = scalar_lea.sflag [#allocation5], 1
    %1470 = vsyncpa %s1469, 1

</llo_original>
